<compile_context>
chip_gen: v7x
topology: tpu7x:2x2x1
jax: 0.10.0
libtpu: 0.0.40
codegen_flags: <defaults>
</compile_context>

<pallas_src>
import jax
import jax.numpy as jnp
from jax import lax
from jax.experimental import pallas as pl
from jax.experimental.pallas import tpu as pltpu

NEG_SLOPE = 0.01   # torch.nn.LeakyReLU default negative_slope
LANE = 128


def _leaky_relu(z):
    return jnp.where(z >= 0, z, NEG_SLOPE * z)


def _round_up(v, m):
    return ((v + m - 1) // m) * m


def _is_v7x():
    """Only v7x has 2 TensorCores per chip; gate the 2-step split on it."""
    try:
        return "v7" in jax.devices()[0].device_kind.lower()
    except Exception:
        return False


def _make_mlp_kernel(n_hidden):
    """Kernel over one batch tile.

    x_ref: (tb, D) native layout.  Weights in PyTorch (out, in) layout; hidden
    layers stacked along a leading axis.  Activations after the first layer are
    feature-major (features, tb) so the batch stays on the 128-wide lane axis
    and the final (1, tb) store is lane-dense and unmasked.
    """
    def kernel(x_ref, w0_ref, b0_ref, wh_ref, bh_ref, wl_ref, bl_ref, o_ref):
        w0 = w0_ref[...]                                  # (ld, D)
        x = x_ref[...].astype(w0.dtype)                   # in-kernel cast (no-op for f32)
        # Fold the (tb, D) -> (D, tb) transpose into the first matmul:
        # contract D of W0 with D of x  ->  (ld, tb), f32 accumulation.
        z = lax.dot_general(w0, x,
                            dimension_numbers=(((1,), (1,)), ((), ())),
                            preferred_element_type=jnp.float32)
        h = _leaky_relu(z + b0_ref[...].astype(jnp.float32))        # (ld, tb)
        for l in range(n_hidden):
            w = wh_ref[l]                                           # (ld, ld)
            z = jnp.dot(w, h.astype(w.dtype),
                        preferred_element_type=jnp.float32)
            h = _leaky_relu(z + bh_ref[l].astype(jnp.float32))
        wl = wl_ref[...]                                            # (1, ld)
        z = jnp.dot(wl, h.astype(wl.dtype),
                    preferred_element_type=jnp.float32)
        o_ref[...] = (z + bl_ref[...].astype(jnp.float32)).astype(o_ref.dtype)
    return kernel


def simple_regressor_forward(x, params, *, output_multiplier=1.0,
                             matmul_dtype=None,
                             x_vmem_budget_bytes=8 << 20,
                             max_hbm_tile_bytes=2 << 20):
    """x: (B, D) float32.  params: list of (W, b), W (out, in), b (out, 1)."""
    B, D = x.shape
    itemsize = jnp.dtype(x.dtype).itemsize
    ld = params[0][0].shape[0]                     # hidden width (layers_dim)

    w0, b0 = params[0]
    wl, bl = params[-1]
    hidden = params[1:-1]
    n_hidden = len(hidden)

    # Fold the static output multiplier into the last layer's constants (exact).
    if output_multiplier != 1.0:
        wl = wl * output_multiplier
        bl = bl * output_multiplier

    # Collapse hidden-layer params into two stacked constants.
    if n_hidden > 0:
        wh = jnp.stack([w for (w, _) in hidden])   # (nh, ld, ld)
        bh = jnp.stack([b for (_, b) in hidden])   # (nh, ld, 1)
    else:
        wh = jnp.zeros((1, ld, ld), w0.dtype)      # dummy, never read
        bh = jnp.zeros((1, ld, 1), b0.dtype)

    # Optional reduced-precision matmul: pre-cast only the tiny weights here;
    # activations are cast in-kernel (x never takes an extra HBM pass).
    if matmul_dtype is not None:
        w0 = w0.astype(matmul_dtype)
        wh = wh.astype(matmul_dtype)
        wl = wl.astype(matmul_dtype)

    # ---- batch tiling: size by bytes, cap by VMEM (lane-padded) budget -------
    b_lane = _round_up(B, LANE)
    d_lanes = _round_up(D, LANE)                   # (tb, D) is lane-padded in VMEM
    tb_vmem = x_vmem_budget_bytes // (2 * d_lanes * itemsize)   # double-buffered
    tb_hbm = max_hbm_tile_bytes // max(1, D * itemsize)
    tb = min(tb_vmem, tb_hbm, b_lane)
    tb = max(LANE, (tb // LANE) * LANE)
    # Only split for megacore on chips that actually have 2 TensorCores (v7x).
    if _is_v7x() and b_lane >= 2 * LANE and b_lane // tb < 2:
        tb = max(LANE, ((b_lane // 2) // LANE) * LANE)

    # Pad x only when the batch is ragged w.r.t. the tile (never unconditionally).
    b_pad = _round_up(B, tb)
    if b_pad != B:
        x = jnp.pad(x, ((0, b_pad - B), (0, 0)))

    in_specs = [
        pl.BlockSpec((tb, D), lambda i: (i, 0)),           # x tile, native layout
        pl.BlockSpec(w0.shape, lambda i: (0, 0)),           # constants: fetched once
        pl.BlockSpec(b0.shape, lambda i: (0, 0)),
        pl.BlockSpec(wh.shape, lambda i: (0, 0, 0)),
        pl.BlockSpec(bh.shape, lambda i: (0, 0, 0)),
        pl.BlockSpec(wl.shape, lambda i: (0, 0)),
        pl.BlockSpec(bl.shape, lambda i: (0, 0)),
    ]

    y = pl.pallas_call(
        _make_mlp_kernel(n_hidden),
        out_shape=jax.ShapeDtypeStruct((1, b_pad), jnp.float32),
        grid=(b_pad // tb,),
        in_specs=in_specs,
        out_specs=pl.BlockSpec((1, tb), lambda i: (0, i)),   # lane-dense store
        compiler_params=pltpu.CompilerParams(
            dimension_semantics=("parallel",),
            vmem_limit_bytes=32 << 20),                      # safe on v5e/v6e/v7x
    )(x, w0, b0, wh, bh, wl, bl)

    # nn.Flatten(start_dim=0): (1, b_pad) -> (B,)
    return y.reshape(b_pad)[:B]


def init_params(key, input_dim, nb_hidden_layers=3, layers_dim=32):
    """nn.Linear-style init, PyTorch layout: W (out, in), b (out, 1)."""
    sizes = [(input_dim, layers_dim)]
    sizes += [(layers_dim, layers_dim)] * nb_hidden_layers
    sizes += [(layers_dim, 1)]
    params = []
    for (fan_in, fan_out) in sizes:
        key, kw, kb = jax.random.split(key, 3)
        bound = 1.0 / (fan_in ** 0.5)
        w = jax.random.uniform(kw, (fan_out, fan_in), jnp.float32, -bound, bound)
        b = jax.random.uniform(kb, (fan_out, 1), jnp.float32, -bound, bound)
        params.append((w, b))
    return params


# TODO(synk): optional last_activation variants (Softplus/ReLU/Sigmoid) of the
# PyTorch module are not wired in; only the default last_activation=None path is.

if __name__ == "__main__":
    key = jax.random.PRNGKey(0)
    key, kx = jax.random.split(key)

    batch, input_dim = 256, 16
    output_multiplier = 2.0
    x = jax.random.normal(kx, (batch, input_dim), jnp.float32)
    params = init_params(key, input_dim, nb_hidden_layers=3, layers_dim=32)

    out = simple_regressor_forward(x, params, output_multiplier=output_multiplier)
    out = jax.block_until_ready(out)

    # Pure-JAX reference of the same forward pass.
    h = x
    for (w, b) in params[:-1]:
        z = h @ w.T + b.reshape(-1)
        h = jnp.where(z >= 0, z, NEG_SLOPE * z)
    w_l, b_l = params[-1]
    ref = output_multiplier * (h @ w_l.T + b_l.reshape(-1)).reshape(batch)

    assert out.shape == (batch,)
    assert jnp.allclose(out, ref, atol=1e-4, rtol=1e-4), \
        float(jnp.max(jnp.abs(out - ref)))

    print("KERNEL_OK")
</pallas_src>

<mosaic_0001>
module attributes {stable_mosaic.version = 11 : i64} {
  func.func @kernel(%arg0: i32, %arg1: memref<256x16xf32, #tpu.memory_space<vmem>>, %arg2: memref<32x16xf32, #tpu.memory_space<vmem>>, %arg3: memref<32x1xf32, #tpu.memory_space<vmem>>, %arg4: memref<3x32x32xf32, #tpu.memory_space<vmem>>, %arg5: memref<3x32x1xf32, #tpu.memory_space<vmem>>, %arg6: memref<1x32xf32, #tpu.memory_space<vmem>>, %arg7: memref<1x1xf32, #tpu.memory_space<vmem>>, %arg8: memref<1x256xf32, #tpu.memory_space<vmem>>) attributes {dimension_semantics = [#tpu.dimension_semantics<parallel>], iteration_bounds = array<i64: 1>, scalar_prefetch = 0 : i64, scratch_operands = 0 : i64, tpu.core_type = #tpu.core_type<tc>, window_params = [{transform_indices = @transform_0, window_bounds = array<i64: 256, 16>}, {pipeline_mode = #tpu.pipeline_mode<synchronous>, transform_indices = @transform_1, window_bounds = array<i64: 32, 16>}, {pipeline_mode = #tpu.pipeline_mode<synchronous>, transform_indices = @transform_2, window_bounds = array<i64: 32, 1>}, {pipeline_mode = #tpu.pipeline_mode<synchronous>, transform_indices = @transform_3, window_bounds = array<i64: 3, 32, 32>}, {pipeline_mode = #tpu.pipeline_mode<synchronous>, transform_indices = @transform_4, window_bounds = array<i64: 3, 32, 1>}, {pipeline_mode = #tpu.pipeline_mode<synchronous>, transform_indices = @transform_5, window_bounds = array<i64: 1, 32>}, {pipeline_mode = #tpu.pipeline_mode<synchronous>, transform_indices = @transform_6, window_bounds = array<i64: 1, 1>}, {transform_indices = @transform_7, window_bounds = array<i64: 1, 256>}]} {
    %c0 = arith.constant 0 : index
    %c0_0 = arith.constant 0 : index
    %0 = vector.load %arg2[%c0, %c0_0] : memref<32x16xf32, #tpu.memory_space<vmem>>, vector<32x16xf32>
    %c0_1 = arith.constant 0 : index
    %c0_2 = arith.constant 0 : index
    %1 = vector.load %arg1[%c0_1, %c0_2] : memref<256x16xf32, #tpu.memory_space<vmem>>, vector<256x16xf32>
    %cst = arith.constant dense<0.000000e+00> : vector<32x256xf32>
    %2 = tpu.matmul %0, %1, %cst {dimension_numbers = #tpu.dot_dimension_numbers<[1], [1], [0], [0], [0, 0, 1, 0], [], []>} : vector<32x16xf32>, vector<256x16xf32>, vector<32x256xf32> -> vector<32x256xf32>
    %c0_3 = arith.constant 0 : index
    %c0_4 = arith.constant 0 : index
    %3 = vector.load %arg3[%c0_3, %c0_4] : memref<32x1xf32, #tpu.memory_space<vmem>>, vector<32x1xf32>
    %4 = vector.broadcast %3 : vector<32x1xf32> to vector<32x256xf32>
    %5 = arith.addf %2, %4 : vector<32x256xf32>
    %cst_5 = arith.constant 0.000000e+00 : f32
    %6 = vector.broadcast %cst_5 : f32 to vector<32x256xf32>
    %7 = arith.cmpf oge, %5, %6 : vector<32x256xf32>
    %cst_6 = arith.constant 0.00999999977 : f32
    %8 = vector.broadcast %cst_6 : f32 to vector<32x256xf32>
    %9 = arith.mulf %8, %5 : vector<32x256xf32>
    %10 = arith.select %7, %5, %9 : vector<32x256xi1>, vector<32x256xf32>
    %c0_7 = arith.constant 0 : index
    %c0_8 = arith.constant 0 : index
    %c0_9 = arith.constant 0 : index
    %11 = vector.load %arg4[%c0_7, %c0_8, %c0_9] : memref<3x32x32xf32, #tpu.memory_space<vmem>>, vector<1x32x32xf32>
    %12 = vector.shape_cast %11 : vector<1x32x32xf32> to vector<32x32xf32>
    %cst_10 = arith.constant dense<0.000000e+00> : vector<32x256xf32>
    %13 = tpu.matmul %12, %10, %cst_10 {dimension_numbers = #tpu.dot_dimension_numbers<[1], [0], [0], [1], [0, 0, 1, 1], [], []>} : vector<32x32xf32>, vector<32x256xf32>, vector<32x256xf32> -> vector<32x256xf32>
    %c0_11 = arith.constant 0 : index
    %c0_12 = arith.constant 0 : index
    %c0_13 = arith.constant 0 : index
    %14 = vector.load %arg5[%c0_11, %c0_12, %c0_13] : memref<3x32x1xf32, #tpu.memory_space<vmem>>, vector<1x32x1xf32>
    %15 = vector.shape_cast %14 : vector<1x32x1xf32> to vector<32x1xf32>
    %16 = vector.broadcast %15 : vector<32x1xf32> to vector<32x256xf32>
    %17 = arith.addf %13, %16 : vector<32x256xf32>
    %cst_14 = arith.constant 0.000000e+00 : f32
    %18 = vector.broadcast %cst_14 : f32 to vector<32x256xf32>
    %19 = arith.cmpf oge, %17, %18 : vector<32x256xf32>
    %cst_15 = arith.constant 0.00999999977 : f32
    %20 = vector.broadcast %cst_15 : f32 to vector<32x256xf32>
    %21 = arith.mulf %20, %17 : vector<32x256xf32>
    %22 = arith.select %19, %17, %21 : vector<32x256xi1>, vector<32x256xf32>
    %c1 = arith.constant 1 : index
    %c0_16 = arith.constant 0 : index
    %c0_17 = arith.constant 0 : index
    %23 = vector.load %arg4[%c1, %c0_16, %c0_17] : memref<3x32x32xf32, #tpu.memory_space<vmem>>, vector<1x32x32xf32>
    %24 = vector.shape_cast %23 : vector<1x32x32xf32> to vector<32x32xf32>
    %cst_18 = arith.constant dense<0.000000e+00> : vector<32x256xf32>
    %25 = tpu.matmul %24, %22, %cst_18 {dimension_numbers = #tpu.dot_dimension_numbers<[1], [0], [0], [1], [0, 0, 1, 1], [], []>} : vector<32x32xf32>, vector<32x256xf32>, vector<32x256xf32> -> vector<32x256xf32>
    %c1_19 = arith.constant 1 : index
    %c0_20 = arith.constant 0 : index
    %c0_21 = arith.constant 0 : index
    %26 = vector.load %arg5[%c1_19, %c0_20, %c0_21] : memref<3x32x1xf32, #tpu.memory_space<vmem>>, vector<1x32x1xf32>
    %27 = vector.shape_cast %26 : vector<1x32x1xf32> to vector<32x1xf32>
    %28 = vector.broadcast %27 : vector<32x1xf32> to vector<32x256xf32>
    %29 = arith.addf %25, %28 : vector<32x256xf32>
    %cst_22 = arith.constant 0.000000e+00 : f32
    %30 = vector.broadcast %cst_22 : f32 to vector<32x256xf32>
    %31 = arith.cmpf oge, %29, %30 : vector<32x256xf32>
    %cst_23 = arith.constant 0.00999999977 : f32
    %32 = vector.broadcast %cst_23 : f32 to vector<32x256xf32>
    %33 = arith.mulf %32, %29 : vector<32x256xf32>
    %34 = arith.select %31, %29, %33 : vector<32x256xi1>, vector<32x256xf32>
    %c2 = arith.constant 2 : index
    %c0_24 = arith.constant 0 : index
    %c0_25 = arith.constant 0 : index
    %35 = vector.load %arg4[%c2, %c0_24, %c0_25] : memref<3x32x32xf32, #tpu.memory_space<vmem>>, vector<1x32x32xf32>
    %36 = vector.shape_cast %35 : vector<1x32x32xf32> to vector<32x32xf32>
    %cst_26 = arith.constant dense<0.000000e+00> : vector<32x256xf32>
    %37 = tpu.matmul %36, %34, %cst_26 {dimension_numbers = #tpu.dot_dimension_numbers<[1], [0], [0], [1], [0, 0, 1, 1], [], []>} : vector<32x32xf32>, vector<32x256xf32>, vector<32x256xf32> -> vector<32x256xf32>
    %c2_27 = arith.constant 2 : index
    %c0_28 = arith.constant 0 : index
    %c0_29 = arith.constant 0 : index
    %38 = vector.load %arg5[%c2_27, %c0_28, %c0_29] : memref<3x32x1xf32, #tpu.memory_space<vmem>>, vector<1x32x1xf32>
    %39 = vector.shape_cast %38 : vector<1x32x1xf32> to vector<32x1xf32>
    %40 = vector.broadcast %39 : vector<32x1xf32> to vector<32x256xf32>
    %41 = arith.addf %37, %40 : vector<32x256xf32>
    %cst_30 = arith.constant 0.000000e+00 : f32
    %42 = vector.broadcast %cst_30 : f32 to vector<32x256xf32>
    %43 = arith.cmpf oge, %41, %42 : vector<32x256xf32>
    %cst_31 = arith.constant 0.00999999977 : f32
    %44 = vector.broadcast %cst_31 : f32 to vector<32x256xf32>
    %45 = arith.mulf %44, %41 : vector<32x256xf32>
    %46 = arith.select %43, %41, %45 : vector<32x256xi1>, vector<32x256xf32>
    %c0_32 = arith.constant 0 : index
    %c0_33 = arith.constant 0 : index
    %47 = vector.load %arg6[%c0_32, %c0_33] : memref<1x32xf32, #tpu.memory_space<vmem>>, vector<1x32xf32>
    %cst_34 = arith.constant dense<0.000000e+00> : vector<1x256xf32>
    %48 = tpu.matmul %47, %46, %cst_34 {dimension_numbers = #tpu.dot_dimension_numbers<[1], [0], [0], [1], [0, 0, 1, 1], [], []>} : vector<1x32xf32>, vector<32x256xf32>, vector<1x256xf32> -> vector<1x256xf32>
    %c0_35 = arith.constant 0 : index
    %c0_36 = arith.constant 0 : index
    %49 = vector.load %arg7[%c0_35, %c0_36] : memref<1x1xf32, #tpu.memory_space<vmem>>, vector<1x1xf32>
    %50 = vector.broadcast %49 : vector<1x1xf32> to vector<1x256xf32>
    %51 = arith.addf %48, %50 : vector<1x256xf32>
    %c0_37 = arith.constant 0 : index
    %c0_38 = arith.constant 0 : index
    %52 = vector.load %arg8[%c0_37, %c0_38] : memref<1x256xf32, #tpu.memory_space<vmem>>, vector<1x256xf32>
    tpu.vector_store %arg8[%c0_37, %c0_38], %51 {strides = array<i32>} : memref<1x256xf32, #tpu.memory_space<vmem>>, vector<1x256xf32>,
    return
  }
  func.func @transform_0(%arg0: i32) -> (i32, i32) {
    %c0_i32 = arith.constant 0 : i32
    %c0_i32_0 = arith.constant 0 : i32
    return %arg0, %c0_i32 : i32, i32
  }
  func.func @transform_1(%arg0: i32) -> (i32, i32) {
    %c0_i32 = arith.constant 0 : i32
    %c0_i32_0 = arith.constant 0 : i32
    %c0_i32_1 = arith.constant 0 : i32
    return %c0_i32, %c0_i32_0 : i32, i32
  }
  func.func @transform_2(%arg0: i32) -> (i32, i32) {
    %c0_i32 = arith.constant 0 : i32
    %c0_i32_0 = arith.constant 0 : i32
    %c0_i32_1 = arith.constant 0 : i32
    return %c0_i32, %c0_i32_0 : i32, i32
  }
  func.func @transform_3(%arg0: i32) -> (i32, i32, i32) {
    %c0_i32 = arith.constant 0 : i32
    %c0_i32_0 = arith.constant 0 : i32
    %c0_i32_1 = arith.constant 0 : i32
    %c0_i32_2 = arith.constant 0 : i32
    return %c0_i32, %c0_i32_0, %c0_i32_1 : i32, i32, i32
  }
  func.func @transform_4(%arg0: i32) -> (i32, i32, i32) {
    %c0_i32 = arith.constant 0 : i32
    %c0_i32_0 = arith.constant 0 : i32
    %c0_i32_1 = arith.constant 0 : i32
    %c0_i32_2 = arith.constant 0 : i32
    return %c0_i32, %c0_i32_0, %c0_i32_1 : i32, i32, i32
  }
  func.func @transform_5(%arg0: i32) -> (i32, i32) {
    %c0_i32 = arith.constant 0 : i32
    %c0_i32_0 = arith.constant 0 : i32
    %c0_i32_1 = arith.constant 0 : i32
    return %c0_i32, %c0_i32_0 : i32, i32
  }
  func.func @transform_6(%arg0: i32) -> (i32, i32) {
    %c0_i32 = arith.constant 0 : i32
    %c0_i32_0 = arith.constant 0 : i32
    %c0_i32_1 = arith.constant 0 : i32
    return %c0_i32, %c0_i32_0 : i32, i32
  }
  func.func @transform_7(%arg0: i32) -> (i32, i32) {
    %c0_i32 = arith.constant 0 : i32
    %c0_i32_0 = arith.constant 0 : i32
    return %c0_i32, %arg0 : i32, i32
  }
}

</mosaic_0001>

<llo_original>
// kernel: tpu_custom_call.1
$region0: #{tpu_custom_call.1}
  #allocation0 [shape = 'u32[]', space=smem, size = 0x4, offset = 0x4, fixed_abs, tag = 'smem constant byte address 0x4 - core index']
  #allocation1 [shape = 'u32[144,128]{1,0:T(1,128)}', space=vmem, size = 0x12000, scoped, tag = 'internal scratch']
  #allocation2 [shape = 'f32[1,1]{1,0:T(1,128)S(1)}', space=vmem, size = 0x200, scoped, tag = 'scoped memory for tpu_custom_call.1']
  %s0 = inlined_call_operand.vmem [shape: f32[256,16], index: 0, kind: input, shape index: {}]
  %s1 = inlined_call_operand.vmem [shape: f32[32,16], index: 1, kind: input, shape index: {}]
  %s2 = inlined_call_operand.vmem [shape: f32[32,1], index: 2, kind: input, shape index: {}]
  %s3 = inlined_call_operand.vmem [shape: f32[3,32,32], index: 3, kind: input, shape index: {}]
  %s4 = inlined_call_operand.vmem [shape: f32[3,32,1], index: 4, kind: input, shape index: {}]
  %s5 = inlined_call_operand.vmem [shape: f32[1,32], index: 5, kind: input, shape index: {}]
  %s6 = inlined_call_operand.<no memory space> [shape: f32[1,1], index: 6, kind: input, shape index: {}]
  %s7 = inlined_call_operand.hbm [shape: f32[1,256], index: 7, kind: output, shape index: {}]
  %s8 = sld [smem:[#allocation0]]
  $region38: #{tpu_custom_call.1} parent=0
    _
  %s10 = ssub.s32 1, %s8
  %s11 = scalar_select 0, %s10, %s8
  %v12 = vstv %s6
  %13 = vst [vmem:[#allocation2] sm:$0x1] %v12
  $region1: #{tpu_custom_call.1} parent=0
    #allocation3 [shape = 'u8[1024]{0}', space=vmem, size = 0x400, scoped, tag = 'output window, operand 0, single buffered']
    #allocation4 [shape = 's32[1]{0}', space=sflag, size = 0x4, scoped, tag = 'scoped memory for tpu_custom_call.1']
    %14 = vsyncpa [#allocation4], 0
    // Predicated region
    $region2: #{tpu_custom_call.1} parent=1 // pred_check
      _
    $region3: #{tpu_custom_call.1} parent=1 // pred_check_branch
      %16 = sbr.rel (0) target = $region5
    $region4: #{tpu_custom_call.1} parent=1 // pred_region
      _
    $region5: #{tpu_custom_call.1} parent=1 // pred_fallthru
      _
    // Predicated region
    $region6: #{tpu_custom_call.1} parent=1 // pred_check
      _
    $region7: #{tpu_custom_call.1} parent=1 // pred_check_branch
      %18 = sbr.rel (0) target = $region9
    $region8: #{tpu_custom_call.1} parent=1 // pred_region
      _
    $region9: #{tpu_custom_call.1} parent=1 // pred_fallthru
      _
    // Predicated region
    $region10: #{tpu_custom_call.1} parent=1 // pred_check
      _
    $region11: #{tpu_custom_call.1} parent=1 // pred_check_branch
      %20 = sbr.rel (0) target = $region13
    $region12: #{tpu_custom_call.1} parent=1 // pred_region
      _
    $region13: #{tpu_custom_call.1} parent=1 // pred_fallthru
      _
    // Predicated region
    $region14: #{tpu_custom_call.1} parent=1 // pred_check
      _
    $region15: #{tpu_custom_call.1} parent=1 // pred_check_branch
      %22 = sbr.rel (0) target = $region17
    $region16: #{tpu_custom_call.1} parent=1 // pred_region
      _
    $region17: #{tpu_custom_call.1} parent=1 // pred_fallthru
      _
    // Predicated region
    $region18: #{tpu_custom_call.1} parent=1 // pred_check
      _
    $region19: #{tpu_custom_call.1} parent=1 // pred_check_branch
      %24 = sbr.rel (0) target = $region21
    $region20: #{tpu_custom_call.1} parent=1 // pred_region
      _
    $region21: #{tpu_custom_call.1} parent=1 // pred_fallthru
      _
    // Predicated region
    $region22: #{tpu_custom_call.1} parent=1 // pred_check
      _
    $region23: #{tpu_custom_call.1} parent=1 // pred_check_branch
      %26 = sbr.rel (0) target = $region25
    $region24: #{tpu_custom_call.1} parent=1 // pred_region
      _
    $region25: #{tpu_custom_call.1} parent=1 // pred_fallthru
      _
    // Predicated region
    $region26: #{tpu_custom_call.1} parent=1 // pred_check
      _
    $region27: #{tpu_custom_call.1} parent=1 // pred_check_branch
      %28 = sbr.rel (0) target = $region29
    $region28: #{tpu_custom_call.1} parent=1 // pred_region
      _
    $region29: #{tpu_custom_call.1} parent=1 // pred_fallthru
      _
    %v29 = vld [vmem:[%s1] sm:$0xff]
    %v30 = vld [vmem:[%s1 + $0x8] sm:$0xff]
    %v31 = vld [vmem:[%s1 + $0x10] sm:$0xff]
    %v32 = vld [vmem:[%s1 + $0x18] sm:$0xff]
    %v33 = vld [vmem:[%s0] sm:$0xff]
    %v34 = vld [vmem:[%s0 + $0x8] sm:$0xff]
    %v35 = vld [vmem:[%s0 + $0x10] sm:$0xff]
    %v36 = vld [vmem:[%s0 + $0x18] sm:$0xff]
    %v37 = vld [vmem:[%s0 + $0x20] sm:$0xff]
    %v38 = vld [vmem:[%s0 + $0x28] sm:$0xff]
    %v39 = vld [vmem:[%s0 + $0x30] sm:$0xff]
    %v40 = vld [vmem:[%s0 + $0x38] sm:$0xff]
    %v41 = vld [vmem:[%s0 + $0x40] sm:$0xff]
    %v42 = vld [vmem:[%s0 + $0x48] sm:$0xff]
    %v43 = vld [vmem:[%s0 + $0x50] sm:$0xff]
    %v44 = vld [vmem:[%s0 + $0x58] sm:$0xff]
    %v45 = vld [vmem:[%s0 + $0x60] sm:$0xff]
    %v46 = vld [vmem:[%s0 + $0x68] sm:$0xff]
    %v47 = vld [vmem:[%s0 + $0x70] sm:$0xff]
    %v48 = vld [vmem:[%s0 + $0x78] sm:$0xff]
    %v49 = vld [vmem:[%s0 + $0x80] sm:$0xff]
    %v50 = vld [vmem:[%s0 + $0x88] sm:$0xff]
    %v51 = vld [vmem:[%s0 + $0x90] sm:$0xff]
    %v52 = vld [vmem:[%s0 + $0x98] sm:$0xff]
    %v53 = vld [vmem:[%s0 + $0xa0] sm:$0xff]
    %v54 = vld [vmem:[%s0 + $0xa8] sm:$0xff]
    %v55 = vld [vmem:[%s0 + $0xb0] sm:$0xff]
    %v56 = vld [vmem:[%s0 + $0xb8] sm:$0xff]
    %v57 = vld [vmem:[%s0 + $0xc0] sm:$0xff]
    %v58 = vld [vmem:[%s0 + $0xc8] sm:$0xff]
    %v59 = vld [vmem:[%s0 + $0xd0] sm:$0xff]
    %v60 = vld [vmem:[%s0 + $0xd8] sm:$0xff]
    %v61 = vld [vmem:[%s0 + $0xe0] sm:$0xff]
    %v62 = vld [vmem:[%s0 + $0xe8] sm:$0xff]
    %v63 = vld [vmem:[%s0 + $0xf0] sm:$0xff]
    %v64 = vld [vmem:[%s0 + $0xf8] sm:$0xff]
    %v65 = vld [vmem:[%s2] sm:$0xff]
    %v66 = vld [vmem:[%s2 + $0x8] sm:$0xff]
    %v67 = vld [vmem:[%s2 + $0x10] sm:$0xff]
    %v68 = vld [vmem:[%s2 + $0x18] sm:$0xff]
    %70 = vset.pattern.permute.xlu0 0
    %71 = vperm.xlu0 %70, %v65
    %v72 = vpop.permute.xlu0 %71
    %75 = vset.pattern.permute.xlu0 0
    %76 = vperm.xlu0 %75, %v66
    %v77 = vpop.permute.xlu0 %76
    %80 = vset.pattern.permute.xlu0 0
    %81 = vperm.xlu0 %80, %v67
    %v82 = vpop.permute.xlu0 %81
    %85 = vset.pattern.permute.xlu0 0
    %86 = vperm.xlu0 %85, %v68
    %v87 = vpop.permute.xlu0 %86
    %vm89 = vcmask 130048
    %v91 = vsel %vm89, %v29, 0
    %v94 = vsel %vm89, %v30, 0
    %v97 = vsel %vm89, %v31, 0
    %v100 = vsel %vm89, %v32, 0
    %v103 = vsel %vm89, %v33, 0
    %v106 = vsel %vm89, %v34, 0
    %v109 = vsel %vm89, %v35, 0
    %v112 = vsel %vm89, %v36, 0
    %v115 = vsel %vm89, %v37, 0
    %v118 = vsel %vm89, %v38, 0
    %v121 = vsel %vm89, %v39, 0
    %v124 = vsel %vm89, %v40, 0
    %v127 = vsel %vm89, %v41, 0
    %v130 = vsel %vm89, %v42, 0
    %v133 = vsel %vm89, %v43, 0
    %v136 = vsel %vm89, %v44, 0
    %v139 = vsel %vm89, %v45, 0
    %v142 = vsel %vm89, %v46, 0
    %v145 = vsel %vm89, %v47, 0
    %v148 = vsel %vm89, %v48, 0
    %v151 = vsel %vm89, %v49, 0
    %v154 = vsel %vm89, %v50, 0
    %v157 = vsel %vm89, %v51, 0
    %v160 = vsel %vm89, %v52, 0
    %v163 = vsel %vm89, %v53, 0
    %v166 = vsel %vm89, %v54, 0
    %v169 = vsel %vm89, %v55, 0
    %v172 = vsel %vm89, %v56, 0
    %v175 = vsel %vm89, %v57, 0
    %v178 = vsel %vm89, %v58, 0
    %v181 = vsel %vm89, %v59, 0
    %v184 = vsel %vm89, %v60, 0
    %v187 = vsel %vm89, %v61, 0
    %v190 = vsel %vm89, %v62, 0
    %v193 = vsel %vm89, %v63, 0
    %v196 = vsel %vm89, %v64, 0
    %198 = vmatprep.subr.mxu0 0.0
    %199 = vmatpush1.xpose.msra.mxu0 %v103
    %200 = vmatprep.subr.mxu0 0.0
    %201 = vmatpush1.xpose.msra.mxu0 %v106
    %202 = vmatprep.subr.mxu0 0.0
    %203 = vmatpush1.xpose.msra.mxu0 %v109
    %204 = vmatprep.subr.mxu0 0.0
    %205 = vmatpush1.xpose.msra.mxu0 %v112
    %206 = vmatprep.subr.mxu0 0.0
    %207 = vmatpush1.xpose.msra.mxu0 %v115
    %208 = vmatprep.subr.mxu0 0.0
    %209 = vmatpush1.xpose.msra.mxu0 %v118
    %210 = vmatprep.subr.mxu0 0.0
    %211 = vmatpush1.xpose.msra.mxu0 %v121
    %212 = vmatprep.subr.mxu0 0.0
    %213 = vmatpush1.xpose.msra.mxu0 %v124
    %214 = vmatprep.subr.mxu0 0.0
    %215 = vmatpush1.xpose.msra.mxu0 %v127
    %216 = vmatprep.subr.mxu0 0.0
    %217 = vmatpush1.xpose.msra.mxu0 %v130
    %218 = vmatprep.subr.mxu0 0.0
    %219 = vmatpush1.xpose.msra.mxu0 %v133
    %220 = vmatprep.subr.mxu0 0.0
    %221 = vmatpush1.xpose.msra.mxu0 %v136
    %222 = vmatprep.subr.mxu0 0.0
    %223 = vmatpush1.xpose.msra.mxu0 %v139
    %224 = vmatprep.subr.mxu0 0.0
    %225 = vmatpush1.xpose.msra.mxu0 %v142
    %226 = vmatprep.subr.mxu0 0.0
    %227 = vmatpush1.xpose.msra.mxu0 %v145
    %228 = vmatprep.subr.mxu0 0.0
    %229 = vmatpush1.xpose.msra.mxu0 %v148
    %230 = vmatprep.subr.mxu0 0.0
    %231 = vmatpush1.xpose.msra.mxu0 %v151
    %232 = vmatprep.subr.mxu0 0.0
    %233 = vmatpush1.xpose.msra.mxu0 %v154
    %234 = vmatprep.subr.mxu0 0.0
    %235 = vmatpush1.xpose.msra.mxu0 %v157
    %236 = vmatprep.subr.mxu0 0.0
    %237 = vmatpush1.xpose.msra.mxu0 %v160
    %238 = vmatprep.subr.mxu0 0.0
    %239 = vmatpush1.xpose.msra.mxu0 %v163
    %240 = vmatprep.subr.mxu0 0.0
    %241 = vmatpush1.xpose.msra.mxu0 %v166
    %242 = vmatprep.subr.mxu0 0.0
    %243 = vmatpush1.xpose.msra.mxu0 %v169
    %244 = vmatprep.subr.mxu0 0.0
    %245 = vmatpush1.xpose.msra.mxu0 %v172
    %246 = vmatprep.subr.mxu0 0.0
    %247 = vmatpush1.xpose.msra.mxu0 %v175
    %248 = vmatprep.subr.mxu0 0.0
    %249 = vmatpush1.xpose.msra.mxu0 %v178
    %250 = vmatprep.subr.mxu0 0.0
    %251 = vmatpush1.xpose.msra.mxu0 %v181
    %252 = vmatprep.subr.mxu0 0.0
    %253 = vmatpush1.xpose.msra.mxu0 %v184
    %254 = vmatprep.subr.mxu0 0.0
    %255 = vmatpush1.xpose.msra.mxu0 %v187
    %256 = vmatprep.subr.mxu0 0.0
    %257 = vmatpush1.xpose.msra.mxu0 %v190
    %258 = vmatprep.subr.mxu0 0.0
    %259 = vmatpush1.xpose.msra.mxu0 %v193
    %260 = vmatprep.subr.mxu0 0.0
    %261 = vmatpush1.xpose.msra.mxu0 %v196
    %262 = vmatprep.mubr.f32.mxu0 0.0
    %263 = vmatmul.mubr.f32.gmra.mrb[0].mxu0 %v91
    %v264 = vpop.f32.mrb[0].mxu0
    %v265 = vadd.f32 %v72, %v264
    %v266 = vpop.f32.mrb[0].mxu0
    %v267 = vadd.f32 %v72, %v266
    %268 = vmatprep.mubr.f32.mxu0 0.0
    %269 = vmatmul.mubr.f32.gmra.mrb[0].mxu0 %v94
    %v270 = vpop.f32.mrb[0].mxu0
    %v271 = vadd.f32 %v77, %v270
    %v272 = vpop.f32.mrb[0].mxu0
    %v273 = vadd.f32 %v77, %v272
    %274 = vmatprep.mubr.f32.mxu0 0.0
    %275 = vmatmul.mubr.f32.gmra.mrb[0].mxu0 %v97
    %v276 = vpop.f32.mrb[0].mxu0
    %v277 = vadd.f32 %v82, %v276
    %v278 = vpop.f32.mrb[0].mxu0
    %v279 = vadd.f32 %v82, %v278
    %280 = vmatprep.mubr.f32.mxu0 0.0
    %281 = vmatmul.mubr.f32.gmra.mrb[0].mxu0 %v100
    %v282 = vpop.f32.mrb[0].mxu0
    %v283 = vadd.f32 %v87, %v282
    %v284 = vpop.f32.mrb[0].mxu0
    %v285 = vadd.f32 %v87, %v284
    %286 = vdwg.mxu0
    %vm287 = vcmp.ge.f32.partialorder %v265, 0.0
    %vm288 = vcmp.ge.f32.partialorder %v267, 0.0
    %vm289 = vcmp.ge.f32.partialorder %v271, 0.0
    %vm290 = vcmp.ge.f32.partialorder %v273, 0.0
    %vm291 = vcmp.ge.f32.partialorder %v277, 0.0
    %vm292 = vcmp.ge.f32.partialorder %v279, 0.0
    %vm293 = vcmp.ge.f32.partialorder %v283, 0.0
    %vm294 = vcmp.ge.f32.partialorder %v285, 0.0
    %v295 = vmul.f32 %v265, 0.01
    %v296 = vmul.f32 %v267, 0.01
    %v297 = vmul.f32 %v271, 0.01
    %v298 = vmul.f32 %v273, 0.01
    %v299 = vmul.f32 %v277, 0.01
    %v300 = vmul.f32 %v279, 0.01
    %v301 = vmul.f32 %v283, 0.01
    %v302 = vmul.f32 %v285, 0.01
    %v303 = vsel %vm287, %v265, %v295
    %v304 = vsel %vm288, %v267, %v296
    %v305 = vsel %vm289, %v271, %v297
    %v306 = vsel %vm290, %v273, %v298
    %v307 = vsel %vm291, %v277, %v299
    %v308 = vsel %vm292, %v279, %v300
    %v309 = vsel %vm293, %v283, %v301
    %v310 = vsel %vm294, %v285, %v302
    %v311 = vld [vmem:[%s3] sm:$0xff]
    %v312 = vld [vmem:[%s3 + $0x8] sm:$0xff]
    %v313 = vld [vmem:[%s3 + $0x10] sm:$0xff]
    %v314 = vld [vmem:[%s3 + $0x18] sm:$0xff]
    %v315 = vld [vmem:[%s4] sm:$0xff]
    %v316 = vld [vmem:[%s4 + $0x8] sm:$0xff]
    %v317 = vld [vmem:[%s4 + $0x10] sm:$0xff]
    %v318 = vld [vmem:[%s4 + $0x18] sm:$0xff]
    %320 = vset.pattern.permute.xlu0 0
    %321 = vperm.xlu0 %320, %v315
    %v322 = vpop.permute.xlu0 %321
    %325 = vset.pattern.permute.xlu0 0
    %326 = vperm.xlu0 %325, %v316
    %v327 = vpop.permute.xlu0 %326
    %330 = vset.pattern.permute.xlu0 0
    %331 = vperm.xlu0 %330, %v317
    %v332 = vpop.permute.xlu0 %331
    %335 = vset.pattern.permute.xlu0 0
    %336 = vperm.xlu0 %335, %v318
    %v337 = vpop.permute.xlu0 %336
    %vm339 = vcmask 261120
    %v341 = vsel %vm339, %v311, 0
    %v344 = vsel %vm339, %v312, 0
    %v347 = vsel %vm339, %v313, 0
    %v350 = vsel %vm339, %v314, 0
    %352 = vmatprep.subr.mxu0 %v304
    %353 = vmatpush1.msra.mxu0 %v303
    %354 = vmatprep.subr.mxu0 %v306
    %355 = vmatpush1.msra.mxu0 %v305
    %356 = vmatprep.subr.mxu0 %v308
    %357 = vmatpush1.msra.mxu0 %v307
    %358 = vmatprep.subr.mxu0 %v310
    %359 = vmatpush1.msra.mxu0 %v309
    %360 = vmatprep.subr.mxu0 0.0
    %361 = vmatpush1.msra.mxu0 0.0
    %362 = vmatprep.subr.mxu0 0.0
    %363 = vmatpush1.msra.mxu0 0.0
    %364 = vmatprep.subr.mxu0 0.0
    %365 = vmatpush1.msra.mxu0 0.0
    %366 = vmatprep.subr.mxu0 0.0
    %367 = vmatpush1.msra.mxu0 0.0
    %368 = vmatprep.subr.mxu0 0.0
    %369 = vmatpush1.msra.mxu0 0.0
    %370 = vmatprep.subr.mxu0 0.0
    %371 = vmatpush1.msra.mxu0 0.0
    %372 = vmatprep.subr.mxu0 0.0
    %373 = vmatpush1.msra.mxu0 0.0
    %374 = vmatprep.subr.mxu0 0.0
    %375 = vmatpush1.msra.mxu0 0.0
    %376 = vmatprep.subr.mxu0 0.0
    %377 = vmatpush1.msra.mxu0 0.0
    %378 = vmatprep.subr.mxu0 0.0
    %379 = vmatpush1.msra.mxu0 0.0
    %380 = vmatprep.subr.mxu0 0.0
    %381 = vmatpush1.msra.mxu0 0.0
    %382 = vmatprep.subr.mxu0 0.0
    %383 = vmatpush1.msra.mxu0 0.0
    %384 = vmatprep.subr.mxu0 0.0
    %385 = vmatpush1.msra.mxu0 0.0
    %386 = vmatprep.subr.mxu0 0.0
    %387 = vmatpush1.msra.mxu0 0.0
    %388 = vmatprep.subr.mxu0 0.0
    %389 = vmatpush1.msra.mxu0 0.0
    %390 = vmatprep.subr.mxu0 0.0
    %391 = vmatpush1.msra.mxu0 0.0
    %392 = vmatprep.subr.mxu0 0.0
    %393 = vmatpush1.msra.mxu0 0.0
    %394 = vmatprep.subr.mxu0 0.0
    %395 = vmatpush1.msra.mxu0 0.0
    %396 = vmatprep.subr.mxu0 0.0
    %397 = vmatpush1.msra.mxu0 0.0
    %398 = vmatprep.subr.mxu0 0.0
    %399 = vmatpush1.msra.mxu0 0.0
    %400 = vmatprep.subr.mxu0 0.0
    %401 = vmatpush1.msra.mxu0 0.0
    %402 = vmatprep.subr.mxu0 0.0
    %403 = vmatpush1.msra.mxu0 0.0
    %404 = vmatprep.subr.mxu0 0.0
    %405 = vmatpush1.msra.mxu0 0.0
    %406 = vmatprep.subr.mxu0 0.0
    %407 = vmatpush1.msra.mxu0 0.0
    %408 = vmatprep.subr.mxu0 0.0
    %409 = vmatpush1.msra.mxu0 0.0
    %410 = vmatprep.subr.mxu0 0.0
    %411 = vmatpush1.msra.mxu0 0.0
    %412 = vmatprep.subr.mxu0 0.0
    %413 = vmatpush1.msra.mxu0 0.0
    %414 = vmatprep.subr.mxu0 0.0
    %415 = vmatpush1.msra.mxu0 0.0
    %416 = vmatprep.mubr.f32.mxu0 0.0
    %417 = vmatmul.mubr.f32.gmra.mrb[0].mxu0 %v341
    %v418 = vpop.f32.mrb[0].mxu0
    %v419 = vadd.f32 %v322, %v418
    %v420 = vpop.f32.mrb[0].mxu0
    %v421 = vadd.f32 %v322, %v420
    %422 = vmatprep.mubr.f32.mxu0 0.0
    %423 = vmatmul.mubr.f32.gmra.mrb[0].mxu0 %v344
    %v424 = vpop.f32.mrb[0].mxu0
    %v425 = vadd.f32 %v327, %v424
    %v426 = vpop.f32.mrb[0].mxu0
    %v427 = vadd.f32 %v327, %v426
    %428 = vmatprep.mubr.f32.mxu0 0.0
    %429 = vmatmul.mubr.f32.gmra.mrb[0].mxu0 %v347
    %v430 = vpop.f32.mrb[0].mxu0
    %v431 = vadd.f32 %v332, %v430
    %v432 = vpop.f32.mrb[0].mxu0
    %v433 = vadd.f32 %v332, %v432
    %434 = vmatprep.mubr.f32.mxu0 0.0
    %435 = vmatmul.mubr.f32.gmra.mrb[0].mxu0 %v350
    %v436 = vpop.f32.mrb[0].mxu0
    %v437 = vadd.f32 %v337, %v436
    %v438 = vpop.f32.mrb[0].mxu0
    %v439 = vadd.f32 %v337, %v438
    %440 = vdwg.mxu0
    %vm441 = vcmp.ge.f32.partialorder %v419, 0.0
    %vm442 = vcmp.ge.f32.partialorder %v421, 0.0
    %vm443 = vcmp.ge.f32.partialorder %v425, 0.0
    %vm444 = vcmp.ge.f32.partialorder %v427, 0.0
    %vm445 = vcmp.ge.f32.partialorder %v431, 0.0
    %vm446 = vcmp.ge.f32.partialorder %v433, 0.0
    %vm447 = vcmp.ge.f32.partialorder %v437, 0.0
    %vm448 = vcmp.ge.f32.partialorder %v439, 0.0
    %v449 = vmul.f32 %v419, 0.01
    %v450 = vmul.f32 %v421, 0.01
    %v451 = vmul.f32 %v425, 0.01
    %v452 = vmul.f32 %v427, 0.01
    %v453 = vmul.f32 %v431, 0.01
    %v454 = vmul.f32 %v433, 0.01
    %v455 = vmul.f32 %v437, 0.01
    %v456 = vmul.f32 %v439, 0.01
    %v457 = vsel %vm441, %v419, %v449
    %v458 = vsel %vm442, %v421, %v450
    %v459 = vsel %vm443, %v425, %v451
    %v460 = vsel %vm444, %v427, %v452
    %v461 = vsel %vm445, %v431, %v453
    %v462 = vsel %vm446, %v433, %v454
    %v463 = vsel %vm447, %v437, %v455
    %v464 = vsel %vm448, %v439, %v456
    %s465 = scalar_lea.vmem %s3, 32
    %v466 = vld [vmem:[%s465] sm:$0xff]
    %v467 = vld [vmem:[%s465 + $0x8] sm:$0xff]
    %v468 = vld [vmem:[%s465 + $0x10] sm:$0xff]
    %v469 = vld [vmem:[%s465 + $0x18] sm:$0xff]
    %s470 = scalar_lea.vmem %s4, 32
    %v471 = vld [vmem:[%s470] sm:$0xff]
    %v472 = vld [vmem:[%s470 + $0x8] sm:$0xff]
    %v473 = vld [vmem:[%s470 + $0x10] sm:$0xff]
    %v474 = vld [vmem:[%s470 + $0x18] sm:$0xff]
    %476 = vset.pattern.permute.xlu0 0
    %477 = vperm.xlu0 %476, %v471
    %v478 = vpop.permute.xlu0 %477
    %481 = vset.pattern.permute.xlu0 0
    %482 = vperm.xlu0 %481, %v472
    %v483 = vpop.permute.xlu0 %482
    %486 = vset.pattern.permute.xlu0 0
    %487 = vperm.xlu0 %486, %v473
    %v488 = vpop.permute.xlu0 %487
    %491 = vset.pattern.permute.xlu0 0
    %492 = vperm.xlu0 %491, %v474
    %v493 = vpop.permute.xlu0 %492
    %v496 = vsel %vm339, %v466, 0
    %v499 = vsel %vm339, %v467, 0
    %v502 = vsel %vm339, %v468, 0
    %v505 = vsel %vm339, %v469, 0
    %507 = vmatprep.subr.mxu0 %v458
    %508 = vmatpush1.msra.mxu0 %v457
    %509 = vmatprep.subr.mxu0 %v460
    %510 = vmatpush1.msra.mxu0 %v459
    %511 = vmatprep.subr.mxu0 %v462
    %512 = vmatpush1.msra.mxu0 %v461
    %513 = vmatprep.subr.mxu0 %v464
    %514 = vmatpush1.msra.mxu0 %v463
    %515 = vmatprep.subr.mxu0 0.0
    %516 = vmatpush1.msra.mxu0 0.0
    %517 = vmatprep.subr.mxu0 0.0
    %518 = vmatpush1.msra.mxu0 0.0
    %519 = vmatprep.subr.mxu0 0.0
    %520 = vmatpush1.msra.mxu0 0.0
    %521 = vmatprep.subr.mxu0 0.0
    %522 = vmatpush1.msra.mxu0 0.0
    %523 = vmatprep.subr.mxu0 0.0
    %524 = vmatpush1.msra.mxu0 0.0
    %525 = vmatprep.subr.mxu0 0.0
    %526 = vmatpush1.msra.mxu0 0.0
    %527 = vmatprep.subr.mxu0 0.0
    %528 = vmatpush1.msra.mxu0 0.0
    %529 = vmatprep.subr.mxu0 0.0
    %530 = vmatpush1.msra.mxu0 0.0
    %531 = vmatprep.subr.mxu0 0.0
    %532 = vmatpush1.msra.mxu0 0.0
    %533 = vmatprep.subr.mxu0 0.0
    %534 = vmatpush1.msra.mxu0 0.0
    %535 = vmatprep.subr.mxu0 0.0
    %536 = vmatpush1.msra.mxu0 0.0
    %537 = vmatprep.subr.mxu0 0.0
    %538 = vmatpush1.msra.mxu0 0.0
    %539 = vmatprep.subr.mxu0 0.0
    %540 = vmatpush1.msra.mxu0 0.0
    %541 = vmatprep.subr.mxu0 0.0
    %542 = vmatpush1.msra.mxu0 0.0
    %543 = vmatprep.subr.mxu0 0.0
    %544 = vmatpush1.msra.mxu0 0.0
    %545 = vmatprep.subr.mxu0 0.0
    %546 = vmatpush1.msra.mxu0 0.0
    %547 = vmatprep.subr.mxu0 0.0
    %548 = vmatpush1.msra.mxu0 0.0
    %549 = vmatprep.subr.mxu0 0.0
    %550 = vmatpush1.msra.mxu0 0.0
    %551 = vmatprep.subr.mxu0 0.0
    %552 = vmatpush1.msra.mxu0 0.0
    %553 = vmatprep.subr.mxu0 0.0
    %554 = vmatpush1.msra.mxu0 0.0
    %555 = vmatprep.subr.mxu0 0.0
    %556 = vmatpush1.msra.mxu0 0.0
    %557 = vmatprep.subr.mxu0 0.0
    %558 = vmatpush1.msra.mxu0 0.0
    %559 = vmatprep.subr.mxu0 0.0
    %560 = vmatpush1.msra.mxu0 0.0
    %561 = vmatprep.subr.mxu0 0.0
    %562 = vmatpush1.msra.mxu0 0.0
    %563 = vmatprep.subr.mxu0 0.0
    %564 = vmatpush1.msra.mxu0 0.0
    %565 = vmatprep.subr.mxu0 0.0
    %566 = vmatpush1.msra.mxu0 0.0
    %567 = vmatprep.subr.mxu0 0.0
    %568 = vmatpush1.msra.mxu0 0.0
    %569 = vmatprep.subr.mxu0 0.0
    %570 = vmatpush1.msra.mxu0 0.0
    %571 = vmatprep.mubr.f32.mxu0 0.0
    %572 = vmatmul.mubr.f32.gmra.mrb[0].mxu0 %v496
    %v573 = vpop.f32.mrb[0].mxu0
    %v574 = vadd.f32 %v478, %v573
    %v575 = vpop.f32.mrb[0].mxu0
    %v576 = vadd.f32 %v478, %v575
    %577 = vmatprep.mubr.f32.mxu0 0.0
    %578 = vmatmul.mubr.f32.gmra.mrb[0].mxu0 %v499
    %v579 = vpop.f32.mrb[0].mxu0
    %v580 = vadd.f32 %v483, %v579
    %v581 = vpop.f32.mrb[0].mxu0
    %v582 = vadd.f32 %v483, %v581
    %583 = vmatprep.mubr.f32.mxu0 0.0
    %584 = vmatmul.mubr.f32.gmra.mrb[0].mxu0 %v502
    %v585 = vpop.f32.mrb[0].mxu0
    %v586 = vadd.f32 %v488, %v585
    %v587 = vpop.f32.mrb[0].mxu0
    %v588 = vadd.f32 %v488, %v587
    %589 = vmatprep.mubr.f32.mxu0 0.0
    %590 = vmatmul.mubr.f32.gmra.mrb[0].mxu0 %v505
    %v591 = vpop.f32.mrb[0].mxu0
    %v592 = vadd.f32 %v493, %v591
    %v593 = vpop.f32.mrb[0].mxu0
    %v594 = vadd.f32 %v493, %v593
    %595 = vdwg.mxu0
    %vm596 = vcmp.ge.f32.partialorder %v574, 0.0
    %vm597 = vcmp.ge.f32.partialorder %v576, 0.0
    %vm598 = vcmp.ge.f32.partialorder %v580, 0.0
    %vm599 = vcmp.ge.f32.partialorder %v582, 0.0
    %vm600 = vcmp.ge.f32.partialorder %v586, 0.0
    %vm601 = vcmp.ge.f32.partialorder %v588, 0.0
    %vm602 = vcmp.ge.f32.partialorder %v592, 0.0
    %vm603 = vcmp.ge.f32.partialorder %v594, 0.0
    %v604 = vmul.f32 %v574, 0.01
    %v605 = vmul.f32 %v576, 0.01
    %v606 = vmul.f32 %v580, 0.01
    %v607 = vmul.f32 %v582, 0.01
    %v608 = vmul.f32 %v586, 0.01
    %v609 = vmul.f32 %v588, 0.01
    %v610 = vmul.f32 %v592, 0.01
    %v611 = vmul.f32 %v594, 0.01
    %v612 = vsel %vm596, %v574, %v604
    %v613 = vsel %vm597, %v576, %v605
    %v614 = vsel %vm598, %v580, %v606
    %v615 = vsel %vm599, %v582, %v607
    %v616 = vsel %vm600, %v586, %v608
    %v617 = vsel %vm601, %v588, %v609
    %v618 = vsel %vm602, %v592, %v610
    %v619 = vsel %vm603, %v594, %v611
    %s620 = scalar_lea.vmem %s3, 64
    %v621 = vld [vmem:[%s620] sm:$0xff]
    %v622 = vld [vmem:[%s620 + $0x8] sm:$0xff]
    %v623 = vld [vmem:[%s620 + $0x10] sm:$0xff]
    %v624 = vld [vmem:[%s620 + $0x18] sm:$0xff]
    %s625 = scalar_lea.vmem %s4, 64
    %v626 = vld [vmem:[%s625] sm:$0xff]
    %v627 = vld [vmem:[%s625 + $0x8] sm:$0xff]
    %v628 = vld [vmem:[%s625 + $0x10] sm:$0xff]
    %v629 = vld [vmem:[%s625 + $0x18] sm:$0xff]
    %631 = vset.pattern.permute.xlu0 0
    %632 = vperm.xlu0 %631, %v626
    %v633 = vpop.permute.xlu0 %632
    %636 = vset.pattern.permute.xlu0 0
    %637 = vperm.xlu0 %636, %v627
    %v638 = vpop.permute.xlu0 %637
    %641 = vset.pattern.permute.xlu0 0
    %642 = vperm.xlu0 %641, %v628
    %v643 = vpop.permute.xlu0 %642
    %646 = vset.pattern.permute.xlu0 0
    %647 = vperm.xlu0 %646, %v629
    %v648 = vpop.permute.xlu0 %647
    %v651 = vsel %vm339, %v621, 0
    %v654 = vsel %vm339, %v622, 0
    %v657 = vsel %vm339, %v623, 0
    %v660 = vsel %vm339, %v624, 0
    %662 = vmatprep.subr.mxu0 %v613
    %663 = vmatpush1.msra.mxu0 %v612
    %664 = vmatprep.subr.mxu0 %v615
    %665 = vmatpush1.msra.mxu0 %v614
    %666 = vmatprep.subr.mxu0 %v617
    %667 = vmatpush1.msra.mxu0 %v616
    %668 = vmatprep.subr.mxu0 %v619
    %669 = vmatpush1.msra.mxu0 %v618
    %670 = vmatprep.subr.mxu0 0.0
    %671 = vmatpush1.msra.mxu0 0.0
    %672 = vmatprep.subr.mxu0 0.0
    %673 = vmatpush1.msra.mxu0 0.0
    %674 = vmatprep.subr.mxu0 0.0
    %675 = vmatpush1.msra.mxu0 0.0
    %676 = vmatprep.subr.mxu0 0.0
    %677 = vmatpush1.msra.mxu0 0.0
    %678 = vmatprep.subr.mxu0 0.0
    %679 = vmatpush1.msra.mxu0 0.0
    %680 = vmatprep.subr.mxu0 0.0
    %681 = vmatpush1.msra.mxu0 0.0
    %682 = vmatprep.subr.mxu0 0.0
    %683 = vmatpush1.msra.mxu0 0.0
    %684 = vmatprep.subr.mxu0 0.0
    %685 = vmatpush1.msra.mxu0 0.0
    %686 = vmatprep.subr.mxu0 0.0
    %687 = vmatpush1.msra.mxu0 0.0
    %688 = vmatprep.subr.mxu0 0.0
    %689 = vmatpush1.msra.mxu0 0.0
    %690 = vmatprep.subr.mxu0 0.0
    %691 = vmatpush1.msra.mxu0 0.0
    %692 = vmatprep.subr.mxu0 0.0
    %693 = vmatpush1.msra.mxu0 0.0
    %694 = vmatprep.subr.mxu0 0.0
    %695 = vmatpush1.msra.mxu0 0.0
    %696 = vmatprep.subr.mxu0 0.0
    %697 = vmatpush1.msra.mxu0 0.0
    %698 = vmatprep.subr.mxu0 0.0
    %699 = vmatpush1.msra.mxu0 0.0
    %700 = vmatprep.subr.mxu0 0.0
    %701 = vmatpush1.msra.mxu0 0.0
    %702 = vmatprep.subr.mxu0 0.0
    %703 = vmatpush1.msra.mxu0 0.0
    %704 = vmatprep.subr.mxu0 0.0
    %705 = vmatpush1.msra.mxu0 0.0
    %706 = vmatprep.subr.mxu0 0.0
    %707 = vmatpush1.msra.mxu0 0.0
    %708 = vmatprep.subr.mxu0 0.0
    %709 = vmatpush1.msra.mxu0 0.0
    %710 = vmatprep.subr.mxu0 0.0
    %711 = vmatpush1.msra.mxu0 0.0
    %712 = vmatprep.subr.mxu0 0.0
    %713 = vmatpush1.msra.mxu0 0.0
    %714 = vmatprep.subr.mxu0 0.0
    %715 = vmatpush1.msra.mxu0 0.0
    %716 = vmatprep.subr.mxu0 0.0
    %717 = vmatpush1.msra.mxu0 0.0
    %718 = vmatprep.subr.mxu0 0.0
    %719 = vmatpush1.msra.mxu0 0.0
    %720 = vmatprep.subr.mxu0 0.0
    %721 = vmatpush1.msra.mxu0 0.0
    %722 = vmatprep.subr.mxu0 0.0
    %723 = vmatpush1.msra.mxu0 0.0
    %724 = vmatprep.subr.mxu0 0.0
    %725 = vmatpush1.msra.mxu0 0.0
    %726 = vmatprep.mubr.f32.mxu0 0.0
    %727 = vmatmul.mubr.f32.gmra.mrb[0].mxu0 %v651
    %v728 = vpop.f32.mrb[0].mxu0
    %v729 = vadd.f32 %v633, %v728
    %v730 = vpop.f32.mrb[0].mxu0
    %v731 = vadd.f32 %v633, %v730
    %732 = vmatprep.mubr.f32.mxu0 0.0
    %733 = vmatmul.mubr.f32.gmra.mrb[0].mxu0 %v654
    %v734 = vpop.f32.mrb[0].mxu0
    %v735 = vadd.f32 %v638, %v734
    %v736 = vpop.f32.mrb[0].mxu0
    %v737 = vadd.f32 %v638, %v736
    %738 = vmatprep.mubr.f32.mxu0 0.0
    %739 = vmatmul.mubr.f32.gmra.mrb[0].mxu0 %v657
    %v740 = vpop.f32.mrb[0].mxu0
    %v741 = vadd.f32 %v643, %v740
    %v742 = vpop.f32.mrb[0].mxu0
    %v743 = vadd.f32 %v643, %v742
    %744 = vmatprep.mubr.f32.mxu0 0.0
    %745 = vmatmul.mubr.f32.gmra.mrb[0].mxu0 %v660
    %v746 = vpop.f32.mrb[0].mxu0
    %v747 = vadd.f32 %v648, %v746
    %v748 = vpop.f32.mrb[0].mxu0
    %v749 = vadd.f32 %v648, %v748
    %750 = vdwg.mxu0
    %vm751 = vcmp.ge.f32.partialorder %v729, 0.0
    %vm752 = vcmp.ge.f32.partialorder %v731, 0.0
    %vm753 = vcmp.ge.f32.partialorder %v735, 0.0
    %vm754 = vcmp.ge.f32.partialorder %v737, 0.0
    %vm755 = vcmp.ge.f32.partialorder %v741, 0.0
    %vm756 = vcmp.ge.f32.partialorder %v743, 0.0
    %vm757 = vcmp.ge.f32.partialorder %v747, 0.0
    %vm758 = vcmp.ge.f32.partialorder %v749, 0.0
    %v759 = vmul.f32 %v729, 0.01
    %v760 = vmul.f32 %v731, 0.01
    %v761 = vmul.f32 %v735, 0.01
    %v762 = vmul.f32 %v737, 0.01
    %v763 = vmul.f32 %v741, 0.01
    %v764 = vmul.f32 %v743, 0.01
    %v765 = vmul.f32 %v747, 0.01
    %v766 = vmul.f32 %v749, 0.01
    %v767 = vsel %vm751, %v729, %v759
    %v768 = vsel %vm752, %v731, %v760
    %v769 = vsel %vm753, %v735, %v761
    %v770 = vsel %vm754, %v737, %v762
    %v771 = vsel %vm755, %v741, %v763
    %v772 = vsel %vm756, %v743, %v764
    %v773 = vsel %vm757, %v747, %v765
    %v774 = vsel %vm758, %v749, %v766
    %v775 = vld [vmem:[%s5] sm:$0x1]
    %v776 = vld [vmem:[#allocation2] sm:$0x1]
    %778 = vset.pattern.permute.xlu0 0
    %779 = vperm.xlu0 %778, %v776
    %v780 = vpop.permute.xlu0 %779
    %v782 = vlaneseq
    %v783 = vshrl.u32 %v782, 7
    %v784 = vsub.s32 0, %v783
    %v785 = vrot.slane %v780, %v784
    %v787 = vsel %vm339, %v775, 0
    %789 = vmatprep.subr.mxu0 %v768
    %790 = vmatpush1.msra.mxu0 %v767
    %791 = vmatprep.subr.mxu0 %v770
    %792 = vmatpush1.msra.mxu0 %v769
    %793 = vmatprep.subr.mxu0 %v772
    %794 = vmatpush1.msra.mxu0 %v771
    %795 = vmatprep.subr.mxu0 %v774
    %796 = vmatpush1.msra.mxu0 %v773
    %797 = vmatprep.subr.mxu0 0.0
    %798 = vmatpush1.msra.mxu0 0.0
    %799 = vmatprep.subr.mxu0 0.0
    %800 = vmatpush1.msra.mxu0 0.0
    %801 = vmatprep.subr.mxu0 0.0
    %802 = vmatpush1.msra.mxu0 0.0
    %803 = vmatprep.subr.mxu0 0.0
    %804 = vmatpush1.msra.mxu0 0.0
    %805 = vmatprep.subr.mxu0 0.0
    %806 = vmatpush1.msra.mxu0 0.0
    %807 = vmatprep.subr.mxu0 0.0
    %808 = vmatpush1.msra.mxu0 0.0
    %809 = vmatprep.subr.mxu0 0.0
    %810 = vmatpush1.msra.mxu0 0.0
    %811 = vmatprep.subr.mxu0 0.0
    %812 = vmatpush1.msra.mxu0 0.0
    %813 = vmatprep.subr.mxu0 0.0
    %814 = vmatpush1.msra.mxu0 0.0
    %815 = vmatprep.subr.mxu0 0.0
    %816 = vmatpush1.msra.mxu0 0.0
    %817 = vmatprep.subr.mxu0 0.0
    %818 = vmatpush1.msra.mxu0 0.0
    %819 = vmatprep.subr.mxu0 0.0
    %820 = vmatpush1.msra.mxu0 0.0
    %821 = vmatprep.subr.mxu0 0.0
    %822 = vmatpush1.msra.mxu0 0.0
    %823 = vmatprep.subr.mxu0 0.0
    %824 = vmatpush1.msra.mxu0 0.0
    %825 = vmatprep.subr.mxu0 0.0
    %826 = vmatpush1.msra.mxu0 0.0
    %827 = vmatprep.subr.mxu0 0.0
    %828 = vmatpush1.msra.mxu0 0.0
    %829 = vmatprep.subr.mxu0 0.0
    %830 = vmatpush1.msra.mxu0 0.0
    %831 = vmatprep.subr.mxu0 0.0
    %832 = vmatpush1.msra.mxu0 0.0
    %833 = vmatprep.subr.mxu0 0.0
    %834 = vmatpush1.msra.mxu0 0.0
    %835 = vmatprep.subr.mxu0 0.0
    %836 = vmatpush1.msra.mxu0 0.0
    %837 = vmatprep.subr.mxu0 0.0
    %838 = vmatpush1.msra.mxu0 0.0
    %839 = vmatprep.subr.mxu0 0.0
    %840 = vmatpush1.msra.mxu0 0.0
    %841 = vmatprep.subr.mxu0 0.0
    %842 = vmatpush1.msra.mxu0 0.0
    %843 = vmatprep.subr.mxu0 0.0
    %844 = vmatpush1.msra.mxu0 0.0
    %845 = vmatprep.subr.mxu0 0.0
    %846 = vmatpush1.msra.mxu0 0.0
    %847 = vmatprep.subr.mxu0 0.0
    %848 = vmatpush1.msra.mxu0 0.0
    %849 = vmatprep.subr.mxu0 0.0
    %850 = vmatpush1.msra.mxu0 0.0
    %851 = vmatprep.subr.mxu0 0.0
    %852 = vmatpush1.msra.mxu0 0.0
    %853 = vmatprep.mubr.f32.mxu0 0.0
    %854 = vmatmul.mubr.f32.gmra.mrb[0].mxu0 %v787
    %v855 = vpop.f32.mrb[0].mxu0
    %v856 = vadd.f32 %v785, %v855
    %v857 = vpop.f32.mrb[0].mxu0
    %v858 = vadd.f32 %v785, %v857
    %859 = vdwg.mxu0
    %v862 = vcombine.low %v856, %v858
    %v864 = vunpack.c.l.s4 1966171168
    %v865 = vunpack.c.0.s8 %v864
    %v866 = vlaneseq
    %v867 = vshrl.u32 %v866, 7
    %v868 = vsub.s32 %v865, %v867
    %v869 = vrot.slane %v862, %v868
    %v871 = vunpack.c.l.s4 1966171168
    %v872 = vunpack.c.0.s8 %v871
    %v873 = vlaneseq
    %v874 = vshrl.u32 %v873, 7
    %v875 = vsub.s32 %v872, %v874
    %v876 = vrot.slane %v869, %v875
    %v878 = vlaneseq
    %vm879 = vcmp.ge.s32.totalorder %v878, 0
    %vm880 = vcmp.lt.s32.totalorder %v878, 256
    %vm881 = vmand %vm879, %vm880
    %882 = vst.msk [vmem:[#allocation3] sm:$0x3] %vm881, %v876
    // Predicated region
    $region30: #{tpu_custom_call.1} parent=1 // pred_check
      _
    $region31: #{tpu_custom_call.1} parent=1 // pred_check_branch
      %884 = sbr.rel (0) target = $region33
    $region32: #{tpu_custom_call.1} parent=1 // pred_region
      %s886 = ssub.s32 32, 32
      %887 = vsyncadd [#allocation4], %s886
      %s889 = sshll.u32 [#allocation3], 4
      %s890 = int_to_ptr.vmem [resolvable:$true] %s889
      %892 = dma.vmem_to_hbm [thread:$0]  %s890, 32, %s7, [#allocation4]
    $region33: #{tpu_custom_call.1} parent=1 // pred_fallthru
      _
    // Predicated region
    $region34: #{tpu_custom_call.1} parent=1 // pred_check
      _
    $region35: #{tpu_custom_call.1} parent=1 // pred_check_branch
      %894 = sbr.rel (0) target = $region37
    $region36: #{tpu_custom_call.1} parent=1 // pred_region
      %895 = dma.done [#allocation4], 32
    $region37: #{tpu_custom_call.1} parent=1 // pred_fallthru
      _
    %896 = vsyncpa [#allocation4], 1

</llo_original>
